<compile_context>
chip_gen: v7x
topology: tpu7x:2x2x1
jax: 0.10.0
libtpu: 0.0.40
codegen_flags: <defaults>
</compile_context>

<pallas_src>
import jax
import jax.numpy as jnp
from jax.experimental import pallas as pl
from jax.experimental.pallas import tpu as pltpu


def _round_up(x, m):
    return ((x + m - 1) // m) * m


def _block_diag(w, pack):
    """Replicate w (C, H) into a (pack*C, pack*H) block-diagonal matrix."""
    if pack == 1:
        return w
    c, h = w.shape
    eye = jnp.eye(pack, dtype=w.dtype)
    return jnp.einsum("pq,ch->pcqh", eye, w).reshape(pack * c, pack * h)


def _adaptive_jump_kernel(x_ref, w1_ref, b1_ref, w2_ref, b2_ref, out_ref):
    # Packed shapes (pack logical rows per physical row):
    #   x:  (TBP, pack*C)      w1: (pack*C, pack*H)    b1: (1, pack*H)
    #   w2: (pack*H, pack*2)   b2: (1, pack*2)         out: (TBP, pack*2)
    x = x_ref[...]

    # Layer 1: lane-dense MXU matmul (K = pack*C = 128 for the default module),
    # f32 accumulation, bias + ReLU on the VPU.
    h1 = jnp.dot(x, w1_ref[...], preferred_element_type=jnp.float32) + b1_ref[...]
    h1 = jnp.maximum(h1, 0.0)

    # Layer 2 fused as a second (block-diagonal) matmul: h1 is read once and the
    # result is pack*2 = 16 lanes wide instead of 2.
    o = jnp.dot(h1, w2_ref[...], preferred_element_type=jnp.float32) + b2_ref[...]

    # Even lanes carry logit0 -> sigmoid (jump_prob),
    # odd lanes carry logit1 -> softplus (jump_scale).
    prob = jax.nn.sigmoid(o)
    # Numerically stable softplus: max(x, 0) + log1p(exp(-|x|)).
    softp = jnp.maximum(o, 0.0) + jnp.log1p(jnp.exp(-jnp.abs(o)))
    lane = jax.lax.broadcasted_iota(jnp.int32, o.shape, dimension=1)
    out_ref[...] = jnp.where(lane % 2 == 0, prob, softp)


def adaptive_jump_forward(h, w1, b1, w2, b2):
    """h: (B, C) f32; w1: (C, H); b1: (H,); w2: (H, 2); b2: (2,).

    Returns (jump_prob (B,), jump_scale (B,)), matching the PyTorch module.
    """
    B, C = h.shape
    H = w1.shape[1]

    # Row-packing factor: put `pack` logical rows on one 128-lane physical row.
    pack = 128 // C if (C <= 128 and 128 % C == 0) else 1

    # Pad B only up to a multiple of `pack` (<= pack-1 rows); never to the tile.
    Bp = _round_up(B, pack)
    x = h if Bp == B else jnp.pad(h, ((0, Bp - B), (0, 0)))
    rows = Bp // pack
    PC, PH, P2 = pack * C, pack * H, pack * 2
    x_packed = x.reshape(rows, PC)          # contiguous row-major reinterpret

    # Block-diagonal weights + tiled biases (tiny; built once per call).
    w1_bd = _block_diag(w1, pack)           # (PC, PH)
    w2_bd = _block_diag(w2, pack)           # (PH, P2)
    b1_p = jnp.tile(b1, pack).reshape(1, PH)
    b2_p = jnp.tile(b2, pack).reshape(1, P2)

    # Packed-row batch tile: ~1 MiB of x per grid step at TBP_MAX, >= 2 steps
    # whenever possible so ("parallel",) engages both TensorCores on v7x.
    TBP_MAX = 2048
    if rows <= 8:
        tbp = rows                                    # single full-extent block
    else:
        tbp = min(TBP_MAX, _round_up(pl.cdiv(rows, 2), 8))
    grid = (pl.cdiv(rows, tbp),)

    cost = pl.CostEstimate(
        flops=2 * Bp * H * (C + 2) + 4 * Bp * H,
        transcendentals=3 * Bp,             # sigmoid exp + softplus exp/log1p
        bytes_accessed=4 * (Bp * C + PC * PH + PH + PH * P2 + P2 + rows * P2),
    )

    out = pl.pallas_call(
        _adaptive_jump_kernel,
        out_shape=jax.ShapeDtypeStruct((rows, P2), jnp.float32),
        grid=grid,
        in_specs=[
            pl.BlockSpec((tbp, PC), lambda i: (i, 0)),   # x: streamed per step
            pl.BlockSpec((PC, PH), lambda i: (0, 0)),    # W1 block-diag: resident
            pl.BlockSpec((1, PH), lambda i: (0, 0)),     # b1: resident
            pl.BlockSpec((PH, P2), lambda i: (0, 0)),    # W2 block-diag: resident
            pl.BlockSpec((1, P2), lambda i: (0, 0)),     # b2: resident
        ],
        out_specs=pl.BlockSpec((tbp, P2), lambda i: (i, 0)),
        compiler_params=pltpu.CompilerParams(
            dimension_semantics=("parallel",),           # megacore sharding on v7x
        ),
        cost_estimate=cost,
    )(x_packed, w1_bd, b1_p, w2_bd, b2_p)

    out = out.reshape(Bp, 2)                             # contiguous reinterpret
    return out[:B, 0], out[:B, 1]


def reference_forward(h, w1, b1, w2, b2):
    h1 = jnp.maximum(h @ w1 + b1, 0.0)
    out = h1 @ w2 + b2
    return jax.nn.sigmoid(out[:, 0]), jax.nn.softplus(out[:, 1])


if __name__ == "__main__":
    COND_DIM, HIDDEN_DIM = 16, 32

    key = jax.random.PRNGKey(0)
    k_x, k_w1, k_b1, k_w2, k_b2, k_x2 = jax.random.split(key, 6)

    # Parameters in math layout (in_features, out_features).
    w1 = jax.random.normal(k_w1, (COND_DIM, HIDDEN_DIM), dtype=jnp.float32) * 0.1
    b1 = jax.random.normal(k_b1, (HIDDEN_DIM,), dtype=jnp.float32) * 0.1
    w2 = jax.random.normal(k_w2, (HIDDEN_DIM, 2), dtype=jnp.float32) * 0.1
    b2 = jax.random.normal(k_b2, (2,), dtype=jnp.float32) * 0.1

    # Case 1: tiny batch -> one packed row, single full-extent block.
    B1 = 8
    x1 = jax.random.normal(k_x, (B1, COND_DIM), dtype=jnp.float32)
    jp1, js1 = adaptive_jump_forward(x1, w1, b1, w2, b2)
    jax.block_until_ready((jp1, js1))
    rp1, rs1 = reference_forward(x1, w1, b1, w2, b2)
    assert jp1.shape == (B1,) and js1.shape == (B1,)
    assert jnp.allclose(jp1, rp1, atol=1e-5, rtol=1e-5)
    assert jnp.allclose(js1, rs1, atol=1e-5, rtol=1e-5)

    # Case 2: exercises the multi-step grid + ragged last block path
    # (600 rows -> 75 packed rows, tbp=40, grid of 2 steps, 2nd block ragged).
    B2 = 600
    x2 = jax.random.normal(k_x2, (B2, COND_DIM), dtype=jnp.float32)
    jp2, js2 = adaptive_jump_forward(x2, w1, b1, w2, b2)
    jax.block_until_ready((jp2, js2))
    rp2, rs2 = reference_forward(x2, w1, b1, w2, b2)
    assert jp2.shape == (B2,) and js2.shape == (B2,)
    assert jnp.allclose(jp2, rp2, atol=1e-5, rtol=1e-5)
    assert jnp.allclose(js2, rs2, atol=1e-5, rtol=1e-5)

    print("KERNEL_OK")
</pallas_src>

<mosaic_0001>
module attributes {stable_mosaic.version = 11 : i64} {
  func.func @_adaptive_jump_kernel(%arg0: i32, %arg1: memref<1x128xf32, #tpu.memory_space<vmem>>, %arg2: memref<128x256xf32, #tpu.memory_space<vmem>>, %arg3: memref<1x256xf32, #tpu.memory_space<vmem>>, %arg4: memref<256x16xf32, #tpu.memory_space<vmem>>, %arg5: memref<1x16xf32, #tpu.memory_space<vmem>>, %arg6: memref<1x16xf32, #tpu.memory_space<vmem>>) attributes {dimension_semantics = [#tpu.dimension_semantics<parallel>], iteration_bounds = array<i64: 1>, scalar_prefetch = 0 : i64, scratch_operands = 0 : i64, tpu.core_type = #tpu.core_type<tc>, window_params = [{transform_indices = @transform_0, window_bounds = array<i64: 1, 128>}, {pipeline_mode = #tpu.pipeline_mode<synchronous>, transform_indices = @transform_1, window_bounds = array<i64: 128, 256>}, {pipeline_mode = #tpu.pipeline_mode<synchronous>, transform_indices = @transform_2, window_bounds = array<i64: 1, 256>}, {pipeline_mode = #tpu.pipeline_mode<synchronous>, transform_indices = @transform_3, window_bounds = array<i64: 256, 16>}, {pipeline_mode = #tpu.pipeline_mode<synchronous>, transform_indices = @transform_4, window_bounds = array<i64: 1, 16>}, {transform_indices = @transform_5, window_bounds = array<i64: 1, 16>}]} {
    %c0 = arith.constant 0 : index
    %c0_0 = arith.constant 0 : index
    %0 = vector.load %arg1[%c0, %c0_0] : memref<1x128xf32, #tpu.memory_space<vmem>>, vector<1x128xf32>
    %c0_1 = arith.constant 0 : index
    %c0_2 = arith.constant 0 : index
    %1 = vector.load %arg2[%c0_1, %c0_2] : memref<128x256xf32, #tpu.memory_space<vmem>>, vector<128x256xf32>
    %cst = arith.constant dense<0.000000e+00> : vector<1x256xf32>
    %2 = tpu.matmul %0, %1, %cst {dimension_numbers = #tpu.dot_dimension_numbers<[1], [0], [0], [1], [0, 0, 1, 1], [], []>} : vector<1x128xf32>, vector<128x256xf32>, vector<1x256xf32> -> vector<1x256xf32>
    %c0_3 = arith.constant 0 : index
    %c0_4 = arith.constant 0 : index
    %3 = vector.load %arg3[%c0_3, %c0_4] : memref<1x256xf32, #tpu.memory_space<vmem>>, vector<1x256xf32>
    %4 = arith.addf %2, %3 : vector<1x256xf32>
    %cst_5 = arith.constant 0.000000e+00 : f32
    %5 = vector.broadcast %cst_5 : f32 to vector<1x256xf32>
    %6 = arith.maximumf %4, %5 : vector<1x256xf32>
    %c0_6 = arith.constant 0 : index
    %c0_7 = arith.constant 0 : index
    %7 = vector.load %arg4[%c0_6, %c0_7] : memref<256x16xf32, #tpu.memory_space<vmem>>, vector<256x16xf32>
    %cst_8 = arith.constant dense<0.000000e+00> : vector<1x16xf32>
    %8 = tpu.matmul %6, %7, %cst_8 {dimension_numbers = #tpu.dot_dimension_numbers<[1], [0], [0], [1], [0, 0, 1, 1], [], []>} : vector<1x256xf32>, vector<256x16xf32>, vector<1x16xf32> -> vector<1x16xf32>
    %c0_9 = arith.constant 0 : index
    %c0_10 = arith.constant 0 : index
    %9 = vector.load %arg5[%c0_9, %c0_10] : memref<1x16xf32, #tpu.memory_space<vmem>>, vector<1x16xf32>
    %10 = arith.addf %8, %9 : vector<1x16xf32>
    %11 = arith.negf %10 : vector<1x16xf32>
    %12 = math.exp %11 : vector<1x16xf32>
    %cst_11 = arith.constant 1.000000e+00 : f32
    %13 = vector.broadcast %cst_11 : f32 to vector<1x16xf32>
    %14 = arith.addf %13, %12 : vector<1x16xf32>
    %15 = arith.divf %13, %14 : vector<1x16xf32>
    %cst_12 = arith.constant 0.000000e+00 : f32
    %16 = vector.broadcast %cst_12 : f32 to vector<1x16xf32>
    %17 = arith.maximumf %10, %16 : vector<1x16xf32>
    %18 = math.absf %10 : vector<1x16xf32>
    %cst_13 = arith.constant 0.000000e+00 : f32
    %19 = vector.broadcast %cst_13 : f32 to vector<1x16xf32>
    %20 = arith.subf %19, %18 : vector<1x16xf32>
    %21 = math.exp %20 : vector<1x16xf32>
    %22 = math.log1p %21 : vector<1x16xf32>
    %23 = arith.addf %17, %22 : vector<1x16xf32>
    %24 = tpu.iota {dimensions = array<i32: 1>} : vector<1x16xi32>
    %c2_i32 = arith.constant 2 : i32
    %c0_i32 = arith.constant 0 : i32
    %25 = arith.cmpi eq, %c2_i32, %c0_i32 : i32
    %c1_i32 = arith.constant 1 : i32
    %26 = arith.select %25, %c1_i32, %c2_i32 : i32
    %27 = vector.broadcast %26 : i32 to vector<1x16xi32>
    %28 = arith.remsi %24, %27 : vector<1x16xi32>
    %c0_i32_14 = arith.constant 0 : i32
    %29 = vector.broadcast %c0_i32_14 : i32 to vector<1x16xi32>
    %30 = arith.cmpi ne, %28, %29 : vector<1x16xi32>
    %c0_i32_15 = arith.constant 0 : i32
    %31 = vector.broadcast %c0_i32_15 : i32 to vector<1x16xi32>
    %32 = arith.cmpi slt, %28, %31 : vector<1x16xi32>
    %c0_i32_16 = arith.constant 0 : i32
    %33 = arith.cmpi slt, %26, %c0_i32_16 : i32
    %34 = vector.broadcast %33 : i1 to vector<1x16xi1>
    %35 = vector.broadcast %34 : vector<1x16xi1> to vector<1x16xi1>
    %36 = arith.xori %32, %35 : vector<1x16xi1>
    %37 = arith.andi %36, %30 : vector<1x16xi1>
    %38 = vector.broadcast %26 : i32 to vector<1x16xi32>
    %39 = arith.addi %28, %38 : vector<1x16xi32>
    %40 = arith.select %37, %39, %28 : vector<1x16xi1>, vector<1x16xi32>
    %c0_i32_17 = arith.constant 0 : i32
    %41 = vector.broadcast %c0_i32_17 : i32 to vector<1x16xi32>
    %42 = arith.cmpi eq, %40, %41 : vector<1x16xi32>
    %43 = arith.select %42, %15, %23 : vector<1x16xi1>, vector<1x16xf32>
    %c0_18 = arith.constant 0 : index
    %c0_19 = arith.constant 0 : index
    %44 = vector.load %arg6[%c0_18, %c0_19] : memref<1x16xf32, #tpu.memory_space<vmem>>, vector<1x16xf32>
    tpu.vector_store %arg6[%c0_18, %c0_19], %43 {strides = array<i32>} : memref<1x16xf32, #tpu.memory_space<vmem>>, vector<1x16xf32>,
    return
  }
  func.func @transform_0(%arg0: i32) -> (i32, i32) {
    %c0_i32 = arith.constant 0 : i32
    %c0_i32_0 = arith.constant 0 : i32
    return %arg0, %c0_i32 : i32, i32
  }
  func.func @transform_1(%arg0: i32) -> (i32, i32) {
    %c0_i32 = arith.constant 0 : i32
    %c0_i32_0 = arith.constant 0 : i32
    %c0_i32_1 = arith.constant 0 : i32
    return %c0_i32, %c0_i32_0 : i32, i32
  }
  func.func @transform_2(%arg0: i32) -> (i32, i32) {
    %c0_i32 = arith.constant 0 : i32
    %c0_i32_0 = arith.constant 0 : i32
    %c0_i32_1 = arith.constant 0 : i32
    return %c0_i32, %c0_i32_0 : i32, i32
  }
  func.func @transform_3(%arg0: i32) -> (i32, i32) {
    %c0_i32 = arith.constant 0 : i32
    %c0_i32_0 = arith.constant 0 : i32
    %c0_i32_1 = arith.constant 0 : i32
    return %c0_i32, %c0_i32_0 : i32, i32
  }
  func.func @transform_4(%arg0: i32) -> (i32, i32) {
    %c0_i32 = arith.constant 0 : i32
    %c0_i32_0 = arith.constant 0 : i32
    %c0_i32_1 = arith.constant 0 : i32
    return %c0_i32, %c0_i32_0 : i32, i32
  }
  func.func @transform_5(%arg0: i32) -> (i32, i32) {
    %c0_i32 = arith.constant 0 : i32
    %c0_i32_0 = arith.constant 0 : i32
    return %arg0, %c0_i32 : i32, i32
  }
}

</mosaic_0001>

<llo_original>
// kernel: tpu_custom_call.1
$region0: #{tpu_custom_call.1}
  #allocation0 [shape = 'u32[]', space=smem, size = 0x4, offset = 0x4, fixed_abs, tag = 'smem constant byte address 0x4 - core index']
  #allocation1 [shape = 'u32[144,128]{1,0:T(1,128)}', space=vmem, size = 0x12000, scoped, tag = 'internal scratch']
  %s0 = inlined_call_operand.vmem [shape: f32[1,128], index: 0, kind: input, shape index: {}]
  %s1 = inlined_call_operand.vmem [shape: f32[128,256], index: 1, kind: input, shape index: {}]
  %s2 = inlined_call_operand.vmem [shape: f32[1,256], index: 2, kind: input, shape index: {}]
  %s3 = inlined_call_operand.vmem [shape: f32[256,16], index: 3, kind: input, shape index: {}]
  %s4 = inlined_call_operand.vmem [shape: f32[1,16], index: 4, kind: input, shape index: {}]
  %s5 = inlined_call_operand.hbm [shape: f32[1,16], index: 5, kind: output, shape index: {}]
  %s6 = sld [smem:[#allocation0]]
  $region30: #{tpu_custom_call.1} parent=0
    _
  %s8 = ssub.s32 1, %s6
  %s9 = scalar_select 0, %s8, %s6
  $region1: #{tpu_custom_call.1} parent=0
    #allocation2 [shape = 'u8[512]{0}', space=vmem, size = 0x400, scoped, tag = 'output window, operand 0, single buffered']
    #allocation3 [shape = 's32[1]{0}', space=sflag, size = 0x4, scoped, tag = 'scoped memory for tpu_custom_call.1']
    %10 = vsyncpa [#allocation3], 0
    // Predicated region
    $region2: #{tpu_custom_call.1} parent=1 // pred_check
      _
    $region3: #{tpu_custom_call.1} parent=1 // pred_check_branch
      %12 = sbr.rel (0) target = $region5
    $region4: #{tpu_custom_call.1} parent=1 // pred_region
      _
    $region5: #{tpu_custom_call.1} parent=1 // pred_fallthru
      _
    // Predicated region
    $region6: #{tpu_custom_call.1} parent=1 // pred_check
      _
    $region7: #{tpu_custom_call.1} parent=1 // pred_check_branch
      %14 = sbr.rel (0) target = $region9
    $region8: #{tpu_custom_call.1} parent=1 // pred_region
      _
    $region9: #{tpu_custom_call.1} parent=1 // pred_fallthru
      _
    // Predicated region
    $region10: #{tpu_custom_call.1} parent=1 // pred_check
      _
    $region11: #{tpu_custom_call.1} parent=1 // pred_check_branch
      %16 = sbr.rel (0) target = $region13
    $region12: #{tpu_custom_call.1} parent=1 // pred_region
      _
    $region13: #{tpu_custom_call.1} parent=1 // pred_fallthru
      _
    // Predicated region
    $region14: #{tpu_custom_call.1} parent=1 // pred_check
      _
    $region15: #{tpu_custom_call.1} parent=1 // pred_check_branch
      %18 = sbr.rel (0) target = $region17
    $region16: #{tpu_custom_call.1} parent=1 // pred_region
      _
    $region17: #{tpu_custom_call.1} parent=1 // pred_fallthru
      _
    // Predicated region
    $region18: #{tpu_custom_call.1} parent=1 // pred_check
      _
    $region19: #{tpu_custom_call.1} parent=1 // pred_check_branch
      %20 = sbr.rel (0) target = $region21
    $region20: #{tpu_custom_call.1} parent=1 // pred_region
      _
    $region21: #{tpu_custom_call.1} parent=1 // pred_fallthru
      _
    %v21 = vld [vmem:[%s0] sm:$0x1]
    %v22 = vld [vmem:[%s1] sm:$0xff]
    %v23 = vld [vmem:[%s1 + $0x8] sm:$0xff]
    %v24 = vld [vmem:[%s1 + $0x10] sm:$0xff]
    %v25 = vld [vmem:[%s1 + $0x18] sm:$0xff]
    %v26 = vld [vmem:[%s1 + $0x20] sm:$0xff]
    %v27 = vld [vmem:[%s1 + $0x28] sm:$0xff]
    %v28 = vld [vmem:[%s1 + $0x30] sm:$0xff]
    %v29 = vld [vmem:[%s1 + $0x38] sm:$0xff]
    %v30 = vld [vmem:[%s1 + $0x40] sm:$0xff]
    %v31 = vld [vmem:[%s1 + $0x48] sm:$0xff]
    %v32 = vld [vmem:[%s1 + $0x50] sm:$0xff]
    %v33 = vld [vmem:[%s1 + $0x58] sm:$0xff]
    %v34 = vld [vmem:[%s1 + $0x60] sm:$0xff]
    %v35 = vld [vmem:[%s1 + $0x68] sm:$0xff]
    %v36 = vld [vmem:[%s1 + $0x70] sm:$0xff]
    %v37 = vld [vmem:[%s1 + $0x78] sm:$0xff]
    %v38 = vld [vmem:[%s1 + $0x80] sm:$0xff]
    %v39 = vld [vmem:[%s1 + $0x88] sm:$0xff]
    %v40 = vld [vmem:[%s1 + $0x90] sm:$0xff]
    %v41 = vld [vmem:[%s1 + $0x98] sm:$0xff]
    %v42 = vld [vmem:[%s1 + $0xa0] sm:$0xff]
    %v43 = vld [vmem:[%s1 + $0xa8] sm:$0xff]
    %v44 = vld [vmem:[%s1 + $0xb0] sm:$0xff]
    %v45 = vld [vmem:[%s1 + $0xb8] sm:$0xff]
    %v46 = vld [vmem:[%s1 + $0xc0] sm:$0xff]
    %v47 = vld [vmem:[%s1 + $0xc8] sm:$0xff]
    %v48 = vld [vmem:[%s1 + $0xd0] sm:$0xff]
    %v49 = vld [vmem:[%s1 + $0xd8] sm:$0xff]
    %v50 = vld [vmem:[%s1 + $0xe0] sm:$0xff]
    %v51 = vld [vmem:[%s1 + $0xe8] sm:$0xff]
    %v52 = vld [vmem:[%s1 + $0xf0] sm:$0xff]
    %v53 = vld [vmem:[%s1 + $0xf8] sm:$0xff]
    %v54 = vld [vmem:[%s2] sm:$0x3]
    %v56 = vlaneseq
    %v57 = vshrl.u32 %v56, 7
    %v58 = vsub.s32 0, %v57
    %v59 = vrot.slane %v54, %v58
    %v60 = vlaneseq
    %v61 = vshrl.u32 %v60, 7
    %v62 = vsub.s32 1, %v61
    %v63 = vrot.slane %v54, %v62
    %66 = vmatprep.subr.mxu0 %v23
    %67 = vmatpush1.msra.mxu0 %v22
    %68 = vmatprep.subr.mxu0 %v25
    %69 = vmatpush1.msra.mxu0 %v24
    %70 = vmatprep.subr.mxu0 %v27
    %71 = vmatpush1.msra.mxu0 %v26
    %72 = vmatprep.subr.mxu0 %v29
    %73 = vmatpush1.msra.mxu0 %v28
    %74 = vmatprep.subr.mxu0 %v31
    %75 = vmatpush1.msra.mxu0 %v30
    %76 = vmatprep.subr.mxu0 %v33
    %77 = vmatpush1.msra.mxu0 %v32
    %78 = vmatprep.subr.mxu0 %v35
    %79 = vmatpush1.msra.mxu0 %v34
    %80 = vmatprep.subr.mxu0 %v37
    %81 = vmatpush1.msra.mxu0 %v36
    %82 = vmatprep.subr.mxu0 %v39
    %83 = vmatpush1.msra.mxu0 %v38
    %84 = vmatprep.subr.mxu0 %v41
    %85 = vmatpush1.msra.mxu0 %v40
    %86 = vmatprep.subr.mxu0 %v43
    %87 = vmatpush1.msra.mxu0 %v42
    %88 = vmatprep.subr.mxu0 %v45
    %89 = vmatpush1.msra.mxu0 %v44
    %90 = vmatprep.subr.mxu0 %v47
    %91 = vmatpush1.msra.mxu0 %v46
    %92 = vmatprep.subr.mxu0 %v49
    %93 = vmatpush1.msra.mxu0 %v48
    %94 = vmatprep.subr.mxu0 %v51
    %95 = vmatpush1.msra.mxu0 %v50
    %96 = vmatprep.subr.mxu0 %v53
    %97 = vmatpush1.msra.mxu0 %v52
    %98 = vmatprep.subr.mxu0 0.0
    %99 = vmatpush1.msra.mxu0 0.0
    %100 = vmatprep.subr.mxu0 0.0
    %101 = vmatpush1.msra.mxu0 0.0
    %102 = vmatprep.subr.mxu0 0.0
    %103 = vmatpush1.msra.mxu0 0.0
    %104 = vmatprep.subr.mxu0 0.0
    %105 = vmatpush1.msra.mxu0 0.0
    %106 = vmatprep.subr.mxu0 0.0
    %107 = vmatpush1.msra.mxu0 0.0
    %108 = vmatprep.subr.mxu0 0.0
    %109 = vmatpush1.msra.mxu0 0.0
    %110 = vmatprep.subr.mxu0 0.0
    %111 = vmatpush1.msra.mxu0 0.0
    %112 = vmatprep.subr.mxu0 0.0
    %113 = vmatpush1.msra.mxu0 0.0
    %114 = vmatprep.subr.mxu0 0.0
    %115 = vmatpush1.msra.mxu0 0.0
    %116 = vmatprep.subr.mxu0 0.0
    %117 = vmatpush1.msra.mxu0 0.0
    %118 = vmatprep.subr.mxu0 0.0
    %119 = vmatpush1.msra.mxu0 0.0
    %120 = vmatprep.subr.mxu0 0.0
    %121 = vmatpush1.msra.mxu0 0.0
    %122 = vmatprep.subr.mxu0 0.0
    %123 = vmatpush1.msra.mxu0 0.0
    %124 = vmatprep.subr.mxu0 0.0
    %125 = vmatpush1.msra.mxu0 0.0
    %126 = vmatprep.subr.mxu0 0.0
    %127 = vmatpush1.msra.mxu0 0.0
    %128 = vmatprep.subr.mxu0 0.0
    %129 = vmatpush1.msra.mxu0 0.0
    %130 = vmatprep.mubr.f32.mxu0 0.0
    %131 = vmatmul.mubr.f32.gmra.mrb[0].mxu0 %v21
    %v132 = vpop.f32.mrb[0].mxu0
    %v133 = vadd.f32 %v59, %v132
    %v134 = vpop.f32.mrb[0].mxu0
    %v135 = vadd.f32 %v63, %v134
    %136 = vdwg.mxu0
    %v137 = vmax.f32 %v133, 0.0
    %v138 = vmax.f32 %v135, 0.0
    %v139 = vld [vmem:[%s3] sm:$0xff]
    %v140 = vld [vmem:[%s3 + $0x8] sm:$0xff]
    %v141 = vld [vmem:[%s3 + $0x10] sm:$0xff]
    %v142 = vld [vmem:[%s3 + $0x18] sm:$0xff]
    %v143 = vld [vmem:[%s3 + $0x20] sm:$0xff]
    %v144 = vld [vmem:[%s3 + $0x28] sm:$0xff]
    %v145 = vld [vmem:[%s3 + $0x30] sm:$0xff]
    %v146 = vld [vmem:[%s3 + $0x38] sm:$0xff]
    %v147 = vld [vmem:[%s3 + $0x40] sm:$0xff]
    %v148 = vld [vmem:[%s3 + $0x48] sm:$0xff]
    %v149 = vld [vmem:[%s3 + $0x50] sm:$0xff]
    %v150 = vld [vmem:[%s3 + $0x58] sm:$0xff]
    %v151 = vld [vmem:[%s3 + $0x60] sm:$0xff]
    %v152 = vld [vmem:[%s3 + $0x68] sm:$0xff]
    %v153 = vld [vmem:[%s3 + $0x70] sm:$0xff]
    %v154 = vld [vmem:[%s3 + $0x78] sm:$0xff]
    %v155 = vld [vmem:[%s3 + $0x80] sm:$0xff]
    %v156 = vld [vmem:[%s3 + $0x88] sm:$0xff]
    %v157 = vld [vmem:[%s3 + $0x90] sm:$0xff]
    %v158 = vld [vmem:[%s3 + $0x98] sm:$0xff]
    %v159 = vld [vmem:[%s3 + $0xa0] sm:$0xff]
    %v160 = vld [vmem:[%s3 + $0xa8] sm:$0xff]
    %v161 = vld [vmem:[%s3 + $0xb0] sm:$0xff]
    %v162 = vld [vmem:[%s3 + $0xb8] sm:$0xff]
    %v163 = vld [vmem:[%s3 + $0xc0] sm:$0xff]
    %v164 = vld [vmem:[%s3 + $0xc8] sm:$0xff]
    %v165 = vld [vmem:[%s3 + $0xd0] sm:$0xff]
    %v166 = vld [vmem:[%s3 + $0xd8] sm:$0xff]
    %v167 = vld [vmem:[%s3 + $0xe0] sm:$0xff]
    %v168 = vld [vmem:[%s3 + $0xe8] sm:$0xff]
    %v169 = vld [vmem:[%s3 + $0xf0] sm:$0xff]
    %v170 = vld [vmem:[%s3 + $0xf8] sm:$0xff]
    %v171 = vld [vmem:[%s4] sm:$0x1]
    %172 = vmatprep.subr.mxu0 0.0
    %173 = vmatpush1.msra.mxu0 %v139
    %174 = vmatprep.subr.mxu0 0.0
    %175 = vmatpush1.msra.mxu0 %v140
    %176 = vmatprep.subr.mxu0 0.0
    %177 = vmatpush1.msra.mxu0 %v141
    %178 = vmatprep.subr.mxu0 0.0
    %179 = vmatpush1.msra.mxu0 %v142
    %180 = vmatprep.subr.mxu0 0.0
    %181 = vmatpush1.msra.mxu0 %v143
    %182 = vmatprep.subr.mxu0 0.0
    %183 = vmatpush1.msra.mxu0 %v144
    %184 = vmatprep.subr.mxu0 0.0
    %185 = vmatpush1.msra.mxu0 %v145
    %186 = vmatprep.subr.mxu0 0.0
    %187 = vmatpush1.msra.mxu0 %v146
    %188 = vmatprep.subr.mxu0 0.0
    %189 = vmatpush1.msra.mxu0 %v147
    %190 = vmatprep.subr.mxu0 0.0
    %191 = vmatpush1.msra.mxu0 %v148
    %192 = vmatprep.subr.mxu0 0.0
    %193 = vmatpush1.msra.mxu0 %v149
    %194 = vmatprep.subr.mxu0 0.0
    %195 = vmatpush1.msra.mxu0 %v150
    %196 = vmatprep.subr.mxu0 0.0
    %197 = vmatpush1.msra.mxu0 %v151
    %198 = vmatprep.subr.mxu0 0.0
    %199 = vmatpush1.msra.mxu0 %v152
    %200 = vmatprep.subr.mxu0 0.0
    %201 = vmatpush1.msra.mxu0 %v153
    %202 = vmatprep.subr.mxu0 0.0
    %203 = vmatpush1.msra.mxu0 %v154
    %204 = vmatprep.subr.mxu0 0.0
    %205 = vmatpush1.msra.mxu0 %v155
    %206 = vmatprep.subr.mxu0 0.0
    %207 = vmatpush1.msra.mxu0 %v156
    %208 = vmatprep.subr.mxu0 0.0
    %209 = vmatpush1.msra.mxu0 %v157
    %210 = vmatprep.subr.mxu0 0.0
    %211 = vmatpush1.msra.mxu0 %v158
    %212 = vmatprep.subr.mxu0 0.0
    %213 = vmatpush1.msra.mxu0 %v159
    %214 = vmatprep.subr.mxu0 0.0
    %215 = vmatpush1.msra.mxu0 %v160
    %216 = vmatprep.subr.mxu0 0.0
    %217 = vmatpush1.msra.mxu0 %v161
    %218 = vmatprep.subr.mxu0 0.0
    %219 = vmatpush1.msra.mxu0 %v162
    %220 = vmatprep.subr.mxu0 0.0
    %221 = vmatpush1.msra.mxu0 %v163
    %222 = vmatprep.subr.mxu0 0.0
    %223 = vmatpush1.msra.mxu0 %v164
    %224 = vmatprep.subr.mxu0 0.0
    %225 = vmatpush1.msra.mxu0 %v165
    %226 = vmatprep.subr.mxu0 0.0
    %227 = vmatpush1.msra.mxu0 %v166
    %228 = vmatprep.subr.mxu0 0.0
    %229 = vmatpush1.msra.mxu0 %v167
    %230 = vmatprep.subr.mxu0 0.0
    %231 = vmatpush1.msra.mxu0 %v168
    %232 = vmatprep.subr.mxu0 0.0
    %233 = vmatpush1.msra.mxu0 %v169
    %234 = vmatprep.subr.mxu0 0.0
    %235 = vmatpush1.msra.mxu0 %v170
    %236 = vmatprep.mubr.f32.mxu0 %v138
    %237 = vmatmul.mubr.f32.gmra.mrb[0].mxu0 %v137
    %v238 = vpop.f32.mrb[0].mxu0
    %v239 = vadd.f32 %v171, %v238
    %v240 = vpop.f32.mrb[0].mxu0
    %241 = vdwg.mxu0
    %v242 = vxor.u32 %v239, 2147483648
    %v243 = vmul.f32 %v242, 1.442695
    %v244 = vpow.pop %v243
    %v245 = vadd.f32 %v244, 1.0
    %v246 = vrcp.pop %v245
    %v247 = vmul.f32 1.0, %v246
    %v248 = vmax.f32 %v239, 0.0
    %v249 = vand.u32 2147483647, %v239
    %v250 = vsub.f32 0.0, %v249
    %v251 = vmul.f32 %v250, 1.442695
    %v252 = vpow.pop %v251
    %v253 = vadd.f32 %v252, 1.0
    %v254 = vlog2.pop %v253
    %v255 = vmul.f32 %v254, 0.6931472
    %v256 = vmul.f32 -0.5, %v252
    %v257 = vadd.f32 %v256, 1.0
    %v258 = vmul.f32 %v257, %v252
    %v259 = vand.u32 2147483647, %v252
    %vm260 = vcmp.lt.f32.partialorder %v259, 0.0004427343
    %v261 = vsel %vm260, %v258, %v255
    %v262 = vadd.f32 %v248, %v261
    %v263 = vlaneseq
    %v264 = vand.u32 %v263, 127
    %vm265 = vcmp.lt.s32.totalorder %v264, 0
    %v266 = vsub.s32 0, %v264
    %v267 = vsel %vm265, %v266, %v264
    %v268 = vshrl.u32 %v267, 1
    %v269 = vand.u32 %v267, 1
    %v270 = vsub.s32 0, %v269
    %v271 = vsel %vm265, %v270, %v269
    %vm272 = vcmp.ne.s32.totalorder %v271, 0
    %vm273 = vcmp.lt.s32.totalorder %v271, 0
    %vm274 = vmand %vm273, %vm272
    %v275 = vadd.s32 %v271, 2
    %v276 = vsel %vm274, %v275, %v271
    %vm277 = vcmp.eq.s32.totalorder %v276, 0
    %v278 = vsel %vm277, %v247, %v262
    %vm279 = vcmask 122880
    %280 = vst.msk [vmem:[#allocation2] sm:$0x1] %vm279, %v278
    // Predicated region
    $region22: #{tpu_custom_call.1} parent=1 // pred_check
      _
    $region23: #{tpu_custom_call.1} parent=1 // pred_check_branch
      %282 = sbr.rel (0) target = $region25
    $region24: #{tpu_custom_call.1} parent=1 // pred_region
      %s284 = ssub.s32 16, 16
      %285 = vsyncadd [#allocation3], %s284
      %s287 = sshll.u32 [#allocation2], 4
      %s288 = int_to_ptr.vmem [resolvable:$true] %s287
      %290 = dma.vmem_to_hbm [thread:$0]  %s288, 16, %s5, [#allocation3]
    $region25: #{tpu_custom_call.1} parent=1 // pred_fallthru
      _
    // Predicated region
    $region26: #{tpu_custom_call.1} parent=1 // pred_check
      _
    $region27: #{tpu_custom_call.1} parent=1 // pred_check_branch
      %292 = sbr.rel (0) target = $region29
    $region28: #{tpu_custom_call.1} parent=1 // pred_region
      %293 = dma.done [#allocation3], 16
    $region29: #{tpu_custom_call.1} parent=1 // pred_fallthru
      _
    %294 = vsyncpa [#allocation3], 1

</llo_original>
